<compile_context>
chip_gen: v7x
topology: tpu7x:2x2x1
jax: 0.10.0
libtpu: 0.0.40
codegen_flags: <defaults>
</compile_context>

<pallas_src>
import jax
import jax.numpy as jnp
from jax import lax
from jax.experimental import pallas as pl
from jax.experimental.pallas import tpu as pltpu


def _round_up(x: int, m: int) -> int:
    return ((x + m - 1) // m) * m


# --------------------------------------------------------------------------
# Fast path: bias-folded tables resident in VMEM, gather via dynamic VMEM loads
# --------------------------------------------------------------------------
def _make_resident_kernel(TB: int, D: int, unroll: int):
    def kernel(uid_ref, iid_ref,            # scalar-prefetched ids (SMEM)
               u_tab_ref, i_tab_ref,        # full tables, resident in VMEM
               out_ref):                    # (TB, D) output tile (VMEM)
        base = pl.program_id(0) * TB

        def body(r, carry):
            u = uid_ref[base + r]
            i = iid_ref[base + r]
            u_row = u_tab_ref[pl.ds(u, 1), :]          # dynamic-row VMEM load
            i_row = i_tab_ref[pl.ds(i, 1), :]
            out_ref[pl.ds(r, 1), :] = u_row * i_row
            return carry

        lax.fori_loop(0, TB, body, 0, unroll=unroll)

    return kernel


# --------------------------------------------------------------------------
# Fallback path: per-row HBM DMA gather, double-buffered across grid steps
# --------------------------------------------------------------------------
def _make_gather_kernel(TB: int, D: int, unroll: int):
    def kernel(uid_ref, iid_ref,            # scalar-prefetched ids (SMEM)
               u_tab_hbm, i_tab_hbm,        # tables stay in HBM (pl.ANY)
               out_ref,                     # (TB, D) output tile (VMEM)
               u_buf, i_buf, sem):          # (2, TB, D) buffers + DMA sems
        t = pl.program_id(0)
        nt = pl.num_programs(0)

        def issue_tile(tile, slot):
            base = tile * TB

            def body(r, carry):
                u = uid_ref[base + r]
                i = iid_ref[base + r]
                pltpu.make_async_copy(
                    u_tab_hbm.at[pl.ds(u, 1), :],
                    u_buf.at[slot, pl.ds(r, 1), :],
                    sem.at[0, slot]).start()
                pltpu.make_async_copy(
                    i_tab_hbm.at[pl.ds(i, 1), :],
                    i_buf.at[slot, pl.ds(r, 1), :],
                    sem.at[1, slot]).start()
                return carry

            lax.fori_loop(0, TB, body, 0, unroll=unroll)

        # Prime: the first grid step issues its own tile into slot 0.
        @pl.when(t == 0)
        def _():
            issue_tile(0, 0)

        # Prefetch the next tile into the other slot BEFORE waiting on this
        # one (ids are already resident in SMEM via scalar prefetch), so tile
        # t+1's HBM gathers overlap tile t's wait/compute/store.
        @pl.when(t + 1 < nt)
        def _():
            issue_tile(t + 1, (t + 1) % 2)

        slot = t % 2
        # Bulk wait: ONE descriptor per semaphore covering the whole slot
        # buffer.  Its byte count equals the sum of the TB row copies issued
        # on that semaphore, so the semaphore accounting matches exactly.
        pltpu.make_async_copy(u_buf.at[slot], u_buf.at[slot], sem.at[0, slot]).wait()
        pltpu.make_async_copy(i_buf.at[slot], i_buf.at[slot], sem.at[1, slot]).wait()

        out_ref[...] = u_buf[slot] * i_buf[slot]

    return kernel


# --------------------------------------------------------------------------
# Wrapper
# --------------------------------------------------------------------------
def gmf_forward(user_ids, item_ids, user_emb, user_bias, item_emb, item_bias,
                *, max_rows_per_tile: int = 256,
                vmem_resident_budget_bytes: int = 24 * 1024 * 1024):
    """Pallas GMF forward: (B, D) = (UE[u]+ub[u]) * (IE[i]+ib[i])."""
    B = int(user_ids.shape[0])
    U, D = int(user_emb.shape[0]), int(user_emb.shape[1])
    I = int(item_emb.shape[0])

    # Fold biases into the tables once (exact: (E + b)[id] == E[id] + b[id]).
    u_tab = user_emb + user_bias            # (U, D)
    i_tab = item_emb + item_bias            # (I, D)
    dt = u_tab.dtype
    itemsize = jnp.dtype(dt).itemsize

    # Pad table rows to a multiple of 8 sublanes (padding rows are never read
    # because all ids are < U, I).
    U_pad = _round_up(max(U, 8), 8)
    I_pad = _round_up(max(I, 8), 8)
    if U_pad != U:
        u_tab = jnp.pad(u_tab, ((0, U_pad - U), (0, 0)))
    if I_pad != I:
        i_tab = jnp.pad(i_tab, ((0, I_pad - I), (0, 0)))

    # Tile size: multiple of 8, capped at max_rows_per_tile, and small enough
    # that the grid has >= 2 tiles whenever the batch allows, so the
    # "parallel" batch axis can shard across both TensorCores on v7x.
    min_tile = 8
    b8 = _round_up(B, min_tile)
    half = _round_up(-(-b8 // 2), min_tile)
    TB = max(min_tile, min(max_rows_per_tile, half))
    B_pad = _round_up(B, TB)

    pad = B_pad - B
    uid = jnp.pad(user_ids.astype(jnp.int32), (0, pad))   # id 0 is always valid
    iid = jnp.pad(item_ids.astype(jnp.int32), (0, pad))

    num_tiles = B_pad // TB
    unroll = min(TB, 8)

    # Conservative VMEM need for the resident fast path (assume each
    # auto-pipelined input could be double-buffered + double-buffered out tile).
    resident_vmem = 2 * (U_pad + I_pad) * D * itemsize + 4 * TB * D * itemsize

    if resident_vmem <= vmem_resident_budget_bytes:
        # ----------------- fast path: tables resident in VMEM ----------------
        grid_spec = pltpu.PrefetchScalarGridSpec(
            num_scalar_prefetch=2,          # user ids, item ids -> SMEM
            grid=(num_tiles,),
            in_specs=[
                # Constant index_map => each table is DMA'd HBM->VMEM once and
                # stays resident for every grid step.
                pl.BlockSpec((U_pad, D), lambda t, u_r, i_r: (0, 0)),
                pl.BlockSpec((I_pad, D), lambda t, u_r, i_r: (0, 0)),
            ],
            out_specs=pl.BlockSpec((TB, D), lambda t, u_r, i_r: (t, 0)),
        )
        out = pl.pallas_call(
            _make_resident_kernel(TB, D, unroll),
            out_shape=jax.ShapeDtypeStruct((B_pad, D), dt),
            grid_spec=grid_spec,
            compiler_params=pltpu.CompilerParams(
                dimension_semantics=("parallel",),   # shard batch tiles on v7x
                vmem_limit_bytes=32 * 1024 * 1024,   # <= physical on v5e/v6e/v7x
            ),
        )(uid, iid, u_tab, i_tab)
    else:
        # ------ fallback: per-row HBM gather, double-buffered across tiles ---
        grid_spec = pltpu.PrefetchScalarGridSpec(
            num_scalar_prefetch=2,
            grid=(num_tiles,),
            in_specs=[
                pl.BlockSpec(memory_space=pl.ANY),   # user table stays in HBM
                pl.BlockSpec(memory_space=pl.ANY),   # item table stays in HBM
            ],
            out_specs=pl.BlockSpec((TB, D), lambda t, u_r, i_r: (t, 0)),
            scratch_shapes=[
                pltpu.VMEM((2, TB, D), dt),          # user rows, 2 slots
                pltpu.VMEM((2, TB, D), dt),          # item rows, 2 slots
                pltpu.SemaphoreType.DMA((2, 2)),     # [user/item, slot]
            ],
        )
        out = pl.pallas_call(
            _make_gather_kernel(TB, D, unroll),
            out_shape=jax.ShapeDtypeStruct((B_pad, D), dt),
            grid_spec=grid_spec,
            compiler_params=pltpu.CompilerParams(
                # Cross-step double-buffering carries state between grid
                # steps, so this axis must not be split across cores.
                dimension_semantics=("arbitrary",),
            ),
        )(uid, iid, u_tab, i_tab)

    return out[:B]


def init_gmf_params(key, user_count, item_count, embedding_dim):
    """Deterministic init matching GMF.__init__: xavier_normal_ embeddings, zero biases."""
    k_u, k_i = jax.random.split(key)
    std_u = (2.0 / (user_count + embedding_dim)) ** 0.5
    std_i = (2.0 / (item_count + embedding_dim)) ** 0.5
    user_emb = std_u * jax.random.normal(k_u, (user_count, embedding_dim), jnp.float32)
    item_emb = std_i * jax.random.normal(k_i, (item_count, embedding_dim), jnp.float32)
    user_bias = jnp.zeros((user_count, 1), jnp.float32)
    item_bias = jnp.zeros((item_count, 1), jnp.float32)
    return user_emb, user_bias, item_emb, item_bias


if __name__ == "__main__":
    key = jax.random.PRNGKey(0)
    k_params, k_user, k_item, k_ub, k_ib = jax.random.split(key, 5)

    USER_COUNT, ITEM_COUNT, EMB_DIM, BATCH = 32, 48, 32, 8

    user_emb, user_bias, item_emb, item_bias = init_gmf_params(
        k_params, USER_COUNT, ITEM_COUNT, EMB_DIM)
    # Module init zeroes the biases; use small non-zero biases here so the
    # bias path of the forward is actually exercised by the check.
    user_bias = 0.01 * jax.random.normal(k_ub, (USER_COUNT, 1), jnp.float32)
    item_bias = 0.01 * jax.random.normal(k_ib, (ITEM_COUNT, 1), jnp.float32)

    user_ids = jax.random.randint(k_user, (BATCH,), 0, USER_COUNT, dtype=jnp.int32)
    item_ids = jax.random.randint(k_item, (BATCH,), 0, ITEM_COUNT, dtype=jnp.int32)

    out = gmf_forward(user_ids, item_ids, user_emb, user_bias, item_emb, item_bias)
    out = jax.block_until_ready(out)

    # Pure-JAX reference of the PyTorch forward.
    u_vec = user_emb[user_ids] + user_bias[user_ids]
    i_vec = item_emb[item_ids] + item_bias[item_ids]
    ref = u_vec * i_vec
    assert out.shape == (BATCH, EMB_DIM), out.shape
    assert jnp.allclose(out, ref, atol=1e-6), "mismatch vs reference"

    print("KERNEL_OK")
</pallas_src>

<mosaic_0001>
module attributes {stable_mosaic.version = 11 : i64} {
  func.func @kernel(%arg0: i32, %arg1: memref<8xi32, #tpu.memory_space<smem>>, %arg2: memref<8xi32, #tpu.memory_space<smem>>, %arg3: memref<32x32xf32, #tpu.memory_space<vmem>>, %arg4: memref<48x32xf32, #tpu.memory_space<vmem>>, %arg5: memref<8x32xf32, #tpu.memory_space<vmem>>) attributes {dimension_semantics = [#tpu.dimension_semantics<parallel>], iteration_bounds = array<i64: 1>, scalar_prefetch = 2 : i64, scratch_operands = 0 : i64, tpu.core_type = #tpu.core_type<tc>, window_params = [{pipeline_mode = #tpu.pipeline_mode<synchronous>, transform_indices = @transform_0, window_bounds = array<i64: 32, 32>}, {pipeline_mode = #tpu.pipeline_mode<synchronous>, transform_indices = @transform_1, window_bounds = array<i64: 48, 32>}, {transform_indices = @transform_2, window_bounds = array<i64: 8, 32>}]} {
    %c8_i32 = arith.constant 8 : i32
    %0 = arith.muli %arg0, %c8_i32 : i32
    %c0_i32 = arith.constant 0 : i32
    %1 = arith.addi %0, %c0_i32 : i32
    %2 = arith.index_cast %1 : i32 to index
    %3 = memref.load %arg1[%2] : memref<8xi32, #tpu.memory_space<smem>>
    %4 = arith.addi %0, %c0_i32 : i32
    %5 = arith.index_cast %4 : i32 to index
    %6 = memref.load %arg2[%5] : memref<8xi32, #tpu.memory_space<smem>>
    %7 = arith.index_cast %3 : i32 to index
    %c0 = arith.constant 0 : index
    %8 = vector.load %arg3[%7, %c0] : memref<32x32xf32, #tpu.memory_space<vmem>>, vector<1x32xf32>
    %9 = arith.index_cast %6 : i32 to index
    %c0_0 = arith.constant 0 : index
    %10 = vector.load %arg4[%9, %c0_0] : memref<48x32xf32, #tpu.memory_space<vmem>>, vector<1x32xf32>
    %11 = arith.mulf %8, %10 : vector<1x32xf32>
    %12 = arith.index_cast %c0_i32 : i32 to index
    %c0_1 = arith.constant 0 : index
    %13 = vector.load %arg5[%12, %c0_1] : memref<8x32xf32, #tpu.memory_space<vmem>>, vector<1x32xf32>
    tpu.vector_store %arg5[%12, %c0_1], %11 {strides = array<i32>} : memref<8x32xf32, #tpu.memory_space<vmem>>, vector<1x32xf32>,
    %c1_i32 = arith.constant 1 : i32
    %14 = arith.addi %0, %c1_i32 : i32
    %15 = arith.index_cast %14 : i32 to index
    %16 = memref.load %arg1[%15] : memref<8xi32, #tpu.memory_space<smem>>
    %17 = arith.addi %0, %c1_i32 : i32
    %18 = arith.index_cast %17 : i32 to index
    %19 = memref.load %arg2[%18] : memref<8xi32, #tpu.memory_space<smem>>
    %20 = arith.index_cast %16 : i32 to index
    %c0_2 = arith.constant 0 : index
    %21 = vector.load %arg3[%20, %c0_2] : memref<32x32xf32, #tpu.memory_space<vmem>>, vector<1x32xf32>
    %22 = arith.index_cast %19 : i32 to index
    %c0_3 = arith.constant 0 : index
    %23 = vector.load %arg4[%22, %c0_3] : memref<48x32xf32, #tpu.memory_space<vmem>>, vector<1x32xf32>
    %24 = arith.mulf %21, %23 : vector<1x32xf32>
    %25 = arith.index_cast %c1_i32 : i32 to index
    %c0_4 = arith.constant 0 : index
    %26 = vector.load %arg5[%25, %c0_4] : memref<8x32xf32, #tpu.memory_space<vmem>>, vector<1x32xf32>
    tpu.vector_store %arg5[%25, %c0_4], %24 {strides = array<i32>} : memref<8x32xf32, #tpu.memory_space<vmem>>, vector<1x32xf32>,
    %c2_i32 = arith.constant 2 : i32
    %27 = arith.addi %0, %c2_i32 : i32
    %28 = arith.index_cast %27 : i32 to index
    %29 = memref.load %arg1[%28] : memref<8xi32, #tpu.memory_space<smem>>
    %30 = arith.addi %0, %c2_i32 : i32
    %31 = arith.index_cast %30 : i32 to index
    %32 = memref.load %arg2[%31] : memref<8xi32, #tpu.memory_space<smem>>
    %33 = arith.index_cast %29 : i32 to index
    %c0_5 = arith.constant 0 : index
    %34 = vector.load %arg3[%33, %c0_5] : memref<32x32xf32, #tpu.memory_space<vmem>>, vector<1x32xf32>
    %35 = arith.index_cast %32 : i32 to index
    %c0_6 = arith.constant 0 : index
    %36 = vector.load %arg4[%35, %c0_6] : memref<48x32xf32, #tpu.memory_space<vmem>>, vector<1x32xf32>
    %37 = arith.mulf %34, %36 : vector<1x32xf32>
    %38 = arith.index_cast %c2_i32 : i32 to index
    %c0_7 = arith.constant 0 : index
    %39 = vector.load %arg5[%38, %c0_7] : memref<8x32xf32, #tpu.memory_space<vmem>>, vector<1x32xf32>
    tpu.vector_store %arg5[%38, %c0_7], %37 {strides = array<i32>} : memref<8x32xf32, #tpu.memory_space<vmem>>, vector<1x32xf32>,
    %c3_i32 = arith.constant 3 : i32
    %40 = arith.addi %0, %c3_i32 : i32
    %41 = arith.index_cast %40 : i32 to index
    %42 = memref.load %arg1[%41] : memref<8xi32, #tpu.memory_space<smem>>
    %43 = arith.addi %0, %c3_i32 : i32
    %44 = arith.index_cast %43 : i32 to index
    %45 = memref.load %arg2[%44] : memref<8xi32, #tpu.memory_space<smem>>
    %46 = arith.index_cast %42 : i32 to index
    %c0_8 = arith.constant 0 : index
    %47 = vector.load %arg3[%46, %c0_8] : memref<32x32xf32, #tpu.memory_space<vmem>>, vector<1x32xf32>
    %48 = arith.index_cast %45 : i32 to index
    %c0_9 = arith.constant 0 : index
    %49 = vector.load %arg4[%48, %c0_9] : memref<48x32xf32, #tpu.memory_space<vmem>>, vector<1x32xf32>
    %50 = arith.mulf %47, %49 : vector<1x32xf32>
    %51 = arith.index_cast %c3_i32 : i32 to index
    %c0_10 = arith.constant 0 : index
    %52 = vector.load %arg5[%51, %c0_10] : memref<8x32xf32, #tpu.memory_space<vmem>>, vector<1x32xf32>
    tpu.vector_store %arg5[%51, %c0_10], %50 {strides = array<i32>} : memref<8x32xf32, #tpu.memory_space<vmem>>, vector<1x32xf32>,
    %c4_i32 = arith.constant 4 : i32
    %53 = arith.addi %0, %c4_i32 : i32
    %54 = arith.index_cast %53 : i32 to index
    %55 = memref.load %arg1[%54] : memref<8xi32, #tpu.memory_space<smem>>
    %56 = arith.addi %0, %c4_i32 : i32
    %57 = arith.index_cast %56 : i32 to index
    %58 = memref.load %arg2[%57] : memref<8xi32, #tpu.memory_space<smem>>
    %59 = arith.index_cast %55 : i32 to index
    %c0_11 = arith.constant 0 : index
    %60 = vector.load %arg3[%59, %c0_11] : memref<32x32xf32, #tpu.memory_space<vmem>>, vector<1x32xf32>
    %61 = arith.index_cast %58 : i32 to index
    %c0_12 = arith.constant 0 : index
    %62 = vector.load %arg4[%61, %c0_12] : memref<48x32xf32, #tpu.memory_space<vmem>>, vector<1x32xf32>
    %63 = arith.mulf %60, %62 : vector<1x32xf32>
    %64 = arith.index_cast %c4_i32 : i32 to index
    %c0_13 = arith.constant 0 : index
    %65 = vector.load %arg5[%64, %c0_13] : memref<8x32xf32, #tpu.memory_space<vmem>>, vector<1x32xf32>
    tpu.vector_store %arg5[%64, %c0_13], %63 {strides = array<i32>} : memref<8x32xf32, #tpu.memory_space<vmem>>, vector<1x32xf32>,
    %c5_i32 = arith.constant 5 : i32
    %66 = arith.addi %0, %c5_i32 : i32
    %67 = arith.index_cast %66 : i32 to index
    %68 = memref.load %arg1[%67] : memref<8xi32, #tpu.memory_space<smem>>
    %69 = arith.addi %0, %c5_i32 : i32
    %70 = arith.index_cast %69 : i32 to index
    %71 = memref.load %arg2[%70] : memref<8xi32, #tpu.memory_space<smem>>
    %72 = arith.index_cast %68 : i32 to index
    %c0_14 = arith.constant 0 : index
    %73 = vector.load %arg3[%72, %c0_14] : memref<32x32xf32, #tpu.memory_space<vmem>>, vector<1x32xf32>
    %74 = arith.index_cast %71 : i32 to index
    %c0_15 = arith.constant 0 : index
    %75 = vector.load %arg4[%74, %c0_15] : memref<48x32xf32, #tpu.memory_space<vmem>>, vector<1x32xf32>
    %76 = arith.mulf %73, %75 : vector<1x32xf32>
    %77 = arith.index_cast %c5_i32 : i32 to index
    %c0_16 = arith.constant 0 : index
    %78 = vector.load %arg5[%77, %c0_16] : memref<8x32xf32, #tpu.memory_space<vmem>>, vector<1x32xf32>
    tpu.vector_store %arg5[%77, %c0_16], %76 {strides = array<i32>} : memref<8x32xf32, #tpu.memory_space<vmem>>, vector<1x32xf32>,
    %c6_i32 = arith.constant 6 : i32
    %79 = arith.addi %0, %c6_i32 : i32
    %80 = arith.index_cast %79 : i32 to index
    %81 = memref.load %arg1[%80] : memref<8xi32, #tpu.memory_space<smem>>
    %82 = arith.addi %0, %c6_i32 : i32
    %83 = arith.index_cast %82 : i32 to index
    %84 = memref.load %arg2[%83] : memref<8xi32, #tpu.memory_space<smem>>
    %85 = arith.index_cast %81 : i32 to index
    %c0_17 = arith.constant 0 : index
    %86 = vector.load %arg3[%85, %c0_17] : memref<32x32xf32, #tpu.memory_space<vmem>>, vector<1x32xf32>
    %87 = arith.index_cast %84 : i32 to index
    %c0_18 = arith.constant 0 : index
    %88 = vector.load %arg4[%87, %c0_18] : memref<48x32xf32, #tpu.memory_space<vmem>>, vector<1x32xf32>
    %89 = arith.mulf %86, %88 : vector<1x32xf32>
    %90 = arith.index_cast %c6_i32 : i32 to index
    %c0_19 = arith.constant 0 : index
    %91 = vector.load %arg5[%90, %c0_19] : memref<8x32xf32, #tpu.memory_space<vmem>>, vector<1x32xf32>
    tpu.vector_store %arg5[%90, %c0_19], %89 {strides = array<i32>} : memref<8x32xf32, #tpu.memory_space<vmem>>, vector<1x32xf32>,
    %c7_i32 = arith.constant 7 : i32
    %92 = arith.addi %0, %c7_i32 : i32
    %93 = arith.index_cast %92 : i32 to index
    %94 = memref.load %arg1[%93] : memref<8xi32, #tpu.memory_space<smem>>
    %95 = arith.addi %0, %c7_i32 : i32
    %96 = arith.index_cast %95 : i32 to index
    %97 = memref.load %arg2[%96] : memref<8xi32, #tpu.memory_space<smem>>
    %98 = arith.index_cast %94 : i32 to index
    %c0_20 = arith.constant 0 : index
    %99 = vector.load %arg3[%98, %c0_20] : memref<32x32xf32, #tpu.memory_space<vmem>>, vector<1x32xf32>
    %100 = arith.index_cast %97 : i32 to index
    %c0_21 = arith.constant 0 : index
    %101 = vector.load %arg4[%100, %c0_21] : memref<48x32xf32, #tpu.memory_space<vmem>>, vector<1x32xf32>
    %102 = arith.mulf %99, %101 : vector<1x32xf32>
    %103 = arith.index_cast %c7_i32 : i32 to index
    %c0_22 = arith.constant 0 : index
    %104 = vector.load %arg5[%103, %c0_22] : memref<8x32xf32, #tpu.memory_space<vmem>>, vector<1x32xf32>
    tpu.vector_store %arg5[%103, %c0_22], %102 {strides = array<i32>} : memref<8x32xf32, #tpu.memory_space<vmem>>, vector<1x32xf32>,
    %c8_i32_23 = arith.constant 8 : i32
    return
  }
  func.func @transform_0(%arg0: i32, %arg1: memref<8xi32, #tpu.memory_space<smem>>, %arg2: memref<8xi32, #tpu.memory_space<smem>>) -> (i32, i32) {
    %c0_i32 = arith.constant 0 : i32
    %c0_i32_0 = arith.constant 0 : i32
    %c0_i32_1 = arith.constant 0 : i32
    return %c0_i32, %c0_i32_0 : i32, i32
  }
  func.func @transform_1(%arg0: i32, %arg1: memref<8xi32, #tpu.memory_space<smem>>, %arg2: memref<8xi32, #tpu.memory_space<smem>>) -> (i32, i32) {
    %c0_i32 = arith.constant 0 : i32
    %c0_i32_0 = arith.constant 0 : i32
    %c0_i32_1 = arith.constant 0 : i32
    return %c0_i32, %c0_i32_0 : i32, i32
  }
  func.func @transform_2(%arg0: i32, %arg1: memref<8xi32, #tpu.memory_space<smem>>, %arg2: memref<8xi32, #tpu.memory_space<smem>>) -> (i32, i32) {
    %c0_i32 = arith.constant 0 : i32
    %c0_i32_0 = arith.constant 0 : i32
    return %arg0, %c0_i32 : i32, i32
  }
}

</mosaic_0001>

<llo_original>
// kernel: tpu_custom_call.1
$region0: #{tpu_custom_call.1}
  #allocation0 [shape = 'u32[]', space=smem, size = 0x4, offset = 0x4, fixed_abs, tag = 'smem constant byte address 0x4 - core index']
  #allocation1 [shape = 'u32[144,128]{1,0:T(1,128)}', space=vmem, size = 0x12000, scoped, tag = 'internal scratch']
  #allocation2 [shape = 's32[1]{0}', space=sflag, size = 0x4, scoped, tag = 'scoped memory for tpu_custom_call.1']
  #allocation3 [shape = 'u8[512]{0}', space=smem, size = 0x200, scoped, tag = 'prefetched SMEM operand 0']
  #allocation4 [shape = 'u8[512]{0}', space=smem, size = 0x200, scoped, tag = 'prefetched SMEM operand 1']
  %s0 = inlined_call_operand.vmem [shape: s32[8], index: 0, kind: input, shape index: {}]
  %s1 = inlined_call_operand.vmem [shape: s32[8], index: 1, kind: input, shape index: {}]
  %s2 = inlined_call_operand.vmem [shape: f32[32,32], index: 2, kind: input, shape index: {}]
  %s3 = inlined_call_operand.vmem [shape: f32[48,32], index: 3, kind: input, shape index: {}]
  %s4 = inlined_call_operand.hbm [shape: f32[8,32], index: 4, kind: output, shape index: {}]
  %s5 = sld [smem:[#allocation0]]
  $region18: #{tpu_custom_call.1} parent=0
    _
  %s7 = ssub.s32 1, %s5
  %s8 = scalar_select 0, %s7, %s5
  %s9 = sshll.u32 %s0, 4
  %s10 = int_to_ptr.vmem [resolvable:$true] %s9
  %12 = dma.vmem_to_smem %s10, 16, [#allocation3], [#allocation2]
  %s13 = sshll.u32 %s1, 4
  %s14 = int_to_ptr.vmem [resolvable:$true] %s13
  %16 = dma.vmem_to_smem %s14, 16, [#allocation4], [#allocation2]
  %17 = dma.done [#allocation2], 32
  %18 = sfence
  $region1: #{tpu_custom_call.1} parent=0
    #allocation5 [shape = 'u8[4096]{0}', space=vmem, size = 0x1000, scoped, tag = 'output window, operand 0, single buffered']
    #allocation6 [shape = 's32[1]{0}', space=sflag, size = 0x4, scoped, tag = 'scoped memory for tpu_custom_call.1']
    %19 = vsyncpa [#allocation6], 0
    // Predicated region
    $region2: #{tpu_custom_call.1} parent=1 // pred_check
      _
    $region3: #{tpu_custom_call.1} parent=1 // pred_check_branch
      %21 = sbr.rel (0) target = $region5
    $region4: #{tpu_custom_call.1} parent=1 // pred_region
      _
    $region5: #{tpu_custom_call.1} parent=1 // pred_fallthru
      _
    // Predicated region
    $region6: #{tpu_custom_call.1} parent=1 // pred_check
      _
    $region7: #{tpu_custom_call.1} parent=1 // pred_check_branch
      %23 = sbr.rel (0) target = $region9
    $region8: #{tpu_custom_call.1} parent=1 // pred_region
      _
    $region9: #{tpu_custom_call.1} parent=1 // pred_fallthru
      _
    %s24 = smul.u32 0, 8
    %s25 = sld [smem:[#allocation3 + %s24]]
    %s26 = sld [smem:[#allocation4 + %s24]]
    %s27 = scalar_lea.vmem %s2, %s25
    %v28 = vld [vmem:[%s27] sm:$0x1]
    %s29 = scalar_lea.vmem %s3, %s26
    %v30 = vld [vmem:[%s29] sm:$0x1]
    %v31 = vmul.f32 %v28, %v30
    %vm32 = vcmask 253952
    %33 = vst.msk [vmem:[#allocation5] sm:$0x1] %vm32, %v31
    %s34 = sadd.s32 %s24, 1
    %s35 = sld [smem:[#allocation3 + %s34]]
    %s36 = sld [smem:[#allocation4 + %s34]]
    %s37 = scalar_lea.vmem %s2, %s35
    %v38 = vld [vmem:[%s37] sm:$0x1]
    %s39 = scalar_lea.vmem %s3, %s36
    %v40 = vld [vmem:[%s39] sm:$0x1]
    %v41 = vmul.f32 %v38, %v40
    %42 = vst.msk [vmem:[#allocation5 + $0x1] sm:$0x1] %vm32, %v41
    %s43 = sadd.s32 %s24, 2
    %s44 = sld [smem:[#allocation3 + %s43]]
    %s45 = sld [smem:[#allocation4 + %s43]]
    %s46 = scalar_lea.vmem %s2, %s44
    %v47 = vld [vmem:[%s46] sm:$0x1]
    %s48 = scalar_lea.vmem %s3, %s45
    %v49 = vld [vmem:[%s48] sm:$0x1]
    %v50 = vmul.f32 %v47, %v49
    %51 = vst.msk [vmem:[#allocation5 + $0x2] sm:$0x1] %vm32, %v50
    %s52 = sadd.s32 %s24, 3
    %s53 = sld [smem:[#allocation3 + %s52]]
    %s54 = sld [smem:[#allocation4 + %s52]]
    %s55 = scalar_lea.vmem %s2, %s53
    %v56 = vld [vmem:[%s55] sm:$0x1]
    %s57 = scalar_lea.vmem %s3, %s54
    %v58 = vld [vmem:[%s57] sm:$0x1]
    %v59 = vmul.f32 %v56, %v58
    %60 = vst.msk [vmem:[#allocation5 + $0x3] sm:$0x1] %vm32, %v59
    %s61 = sadd.s32 %s24, 4
    %s62 = sld [smem:[#allocation3 + %s61]]
    %s63 = sld [smem:[#allocation4 + %s61]]
    %s64 = scalar_lea.vmem %s2, %s62
    %v65 = vld [vmem:[%s64] sm:$0x1]
    %s66 = scalar_lea.vmem %s3, %s63
    %v67 = vld [vmem:[%s66] sm:$0x1]
    %v68 = vmul.f32 %v65, %v67
    %69 = vst.msk [vmem:[#allocation5 + $0x4] sm:$0x1] %vm32, %v68
    %s70 = sadd.s32 %s24, 5
    %s71 = sld [smem:[#allocation3 + %s70]]
    %s72 = sld [smem:[#allocation4 + %s70]]
    %s73 = scalar_lea.vmem %s2, %s71
    %v74 = vld [vmem:[%s73] sm:$0x1]
    %s75 = scalar_lea.vmem %s3, %s72
    %v76 = vld [vmem:[%s75] sm:$0x1]
    %v77 = vmul.f32 %v74, %v76
    %78 = vst.msk [vmem:[#allocation5 + $0x5] sm:$0x1] %vm32, %v77
    %s79 = sadd.s32 %s24, 6
    %s80 = sld [smem:[#allocation3 + %s79]]
    %s81 = sld [smem:[#allocation4 + %s79]]
    %s82 = scalar_lea.vmem %s2, %s80
    %v83 = vld [vmem:[%s82] sm:$0x1]
    %s84 = scalar_lea.vmem %s3, %s81
    %v85 = vld [vmem:[%s84] sm:$0x1]
    %v86 = vmul.f32 %v83, %v85
    %87 = vst.msk [vmem:[#allocation5 + $0x6] sm:$0x1] %vm32, %v86
    %s88 = sadd.s32 %s24, 7
    %s89 = sld [smem:[#allocation3 + %s88]]
    %s90 = sld [smem:[#allocation4 + %s88]]
    %s91 = scalar_lea.vmem %s2, %s89
    %v92 = vld [vmem:[%s91] sm:$0x1]
    %s93 = scalar_lea.vmem %s3, %s90
    %v94 = vld [vmem:[%s93] sm:$0x1]
    %v95 = vmul.f32 %v92, %v94
    %96 = vst.msk [vmem:[#allocation5 + $0x7] sm:$0x1] %vm32, %v95
    // Predicated region
    $region10: #{tpu_custom_call.1} parent=1 // pred_check
      _
    $region11: #{tpu_custom_call.1} parent=1 // pred_check_branch
      %98 = sbr.rel (0) target = $region13
    $region12: #{tpu_custom_call.1} parent=1 // pred_region
      %s100 = ssub.s32 128, 128
      %101 = vsyncadd [#allocation6], %s100
      %s103 = sshll.u32 [#allocation5], 4
      %s104 = int_to_ptr.vmem [resolvable:$true] %s103
      %106 = dma.vmem_to_hbm [thread:$0]  %s104, 128, %s4, [#allocation6]
    $region13: #{tpu_custom_call.1} parent=1 // pred_fallthru
      _
    // Predicated region
    $region14: #{tpu_custom_call.1} parent=1 // pred_check
      _
    $region15: #{tpu_custom_call.1} parent=1 // pred_check_branch
      %108 = sbr.rel (0) target = $region17
    $region16: #{tpu_custom_call.1} parent=1 // pred_region
      %109 = dma.done [#allocation6], 128
    $region17: #{tpu_custom_call.1} parent=1 // pred_fallthru
      _
    %110 = vsyncpa [#allocation6], 1

</llo_original>
